<compile_context>
chip_gen: v6e
topology: v6e:2x2x1
jax: 0.10.0
libtpu: 0.0.40
codegen_flags: <defaults>
</compile_context>

<pallas_src>
import functools

import numpy as np
import jax
import jax.numpy as jnp
from jax.experimental import pallas as pl
from jax.experimental.pallas import tpu as pltpu

LANE = 128


# ----------------------------------------------------------------------------
# helpers
# ----------------------------------------------------------------------------
def _round_up(x, m):
    return (x + m - 1) // m * m


def _pad_to(arr, shape, dtype):
    arr = arr.astype(dtype)
    pads = [(0, t - s) for s, t in zip(arr.shape, shape)]
    if any(p[1] for p in pads):
        arr = jnp.pad(arr, pads)
    return arr


def _vmem_budget_bytes():
    """~75% of physical VMEM (48 MiB on v7x, 96 MiB on v5e/v6e)."""
    try:
        cap = pltpu.get_tpu_info().vmem_capacity_bytes
    except Exception:
        cap = 64 << 20  # conservative (v7x-sized) fallback
    budget = int(cap) * 3 // 4
    return max(min(budget, 100 << 20), 32 << 20)


def _pick_tile(n):
    """Largest row tile in {128..1024} with <=25% row padding and >=2 row
    tiles (so the 'parallel' axis can feed both v7x TensorCores)."""
    n128 = _round_up(n, LANE)
    tm = LANE
    for t in (256, 512, 1024):
        n_t = _round_up(n, t)
        if n_t <= int(1.25 * n128) and n_t // t >= 2:
            tm = t
    return tm


def _block_schedule(a_p, tm, tk):
    """Compacted per-row-tile list of nonzero A column blocks.

    Returns (cols, valid, max_c): cols[i, s] is the s-th nonzero column-block
    index of row tile i (repeated past the end so Pallas elides the DMA),
    valid[i, s] says whether that slot carries real work.
    """
    n_pad = a_p.shape[0]
    r, kb = n_pad // tm, n_pad // tk
    bm = np.asarray(jnp.any((a_p != 0).reshape(r, tm, kb, tk), axis=(1, 3)))
    counts = bm.sum(axis=1)
    max_c = max(int(counts.max()) if counts.size else 0, 1)
    cols = np.zeros((r, max_c), np.int32)
    valid = np.zeros((r, max_c), np.int32)
    for i in range(r):
        nz = np.flatnonzero(bm[i])
        c = nz.size
        if c:
            cols[i, :c] = nz
            cols[i, c:] = nz[-1]  # repeat -> no new DMA for padded slots
            valid[i, :c] = 1
    return jnp.asarray(cols), jnp.asarray(valid), max_c


# ----------------------------------------------------------------------------
# fast path: whole 2-layer forward in a single VMEM-resident kernel
# ----------------------------------------------------------------------------
def _fused_small_kernel(a_ref, x_ref, w1_ref, b1_ref, w2_ref, b2_ref, o_ref):
    xw1 = jnp.dot(x_ref[...], w1_ref[...],
                  preferred_element_type=jnp.float32).astype(jnp.bfloat16)
    h1 = jnp.dot(a_ref[...], xw1, preferred_element_type=jnp.float32) + b1_ref[...]
    h1 = jnp.maximum(h1, 0.0).astype(jnp.bfloat16)
    # TODO(synk): F.dropout(p=0.5, training=True) not emitted; eval-mode identity.
    xw2 = jnp.dot(h1, w2_ref[...],
                  preferred_element_type=jnp.float32).astype(jnp.bfloat16)
    o_ref[...] = jnp.dot(a_ref[...], xw2,
                         preferred_element_type=jnp.float32) + b2_ref[...]


def _fused_small(a, x, w1, b1, w2, b2, budget):
    n_pad, f = x.shape
    h = w1.shape[1]
    c = w2.shape[1]
    return pl.pallas_call(
        _fused_small_kernel,
        out_shape=jax.ShapeDtypeStruct((n_pad, c), jnp.float32),
        grid=(1,),
        in_specs=[
            pl.BlockSpec((n_pad, n_pad), lambda i: (0, 0)),
            pl.BlockSpec((n_pad, f), lambda i: (0, 0)),
            pl.BlockSpec((f, h), lambda i: (0, 0)),
            pl.BlockSpec((1, h), lambda i: (0, 0)),
            pl.BlockSpec((h, c), lambda i: (0, 0)),
            pl.BlockSpec((1, c), lambda i: (0, 0)),
        ],
        out_specs=pl.BlockSpec((n_pad, c), lambda i: (0, 0)),
        compiler_params=pltpu.CompilerParams(vmem_limit_bytes=budget),
    )(a, x, w1, b1, w2, b2)


# ----------------------------------------------------------------------------
# kernel 1 (tiled path): feature transform  XW1 = X @ W1   (bf16, f32 acc)
# ----------------------------------------------------------------------------
def _xw_kernel(x_ref, w_ref, o_ref):
    o_ref[...] = jnp.dot(x_ref[...], w_ref[...],
                         preferred_element_type=jnp.float32).astype(o_ref.dtype)


def _xw_matmul(x, w, tm, budget):
    n, f = x.shape
    h = w.shape[1]
    return pl.pallas_call(
        _xw_kernel,
        out_shape=jax.ShapeDtypeStruct((n, h), jnp.bfloat16),
        grid=(n // tm,),
        in_specs=[
            pl.BlockSpec((tm, f), lambda i: (i, 0)),   # F kept at its real size
            pl.BlockSpec((f, h), lambda i: (0, 0)),
        ],
        out_specs=pl.BlockSpec((tm, h), lambda i: (i, 0)),
        compiler_params=pltpu.CompilerParams(
            dimension_semantics=("parallel",),
            vmem_limit_bytes=budget,
        ),
    )(x, w)


# ----------------------------------------------------------------------------
# kernel 2 (tiled path): block-sparse propagation
#   out = [relu](A_hat @ XW + b) [@ W2]
#   grid = (row tiles, compacted nonzero col-block slots)
# ----------------------------------------------------------------------------
def _prop_kernel(*refs, tk, xw_resident, relu, fuse_w2):
    if fuse_w2:
        cols_ref, valid_ref, a_ref, xw_ref, b_ref, w2_ref, o_ref, acc_ref = refs
    else:
        cols_ref, valid_ref, a_ref, xw_ref, b_ref, o_ref, acc_ref = refs
        w2_ref = None

    i = pl.program_id(0)
    s = pl.program_id(1)

    @pl.when(s == 0)
    def _():
        # fold the bias into the accumulator init (no epilogue VPU add)
        acc_ref[...] = jnp.broadcast_to(b_ref[...], acc_ref.shape)

    @pl.when(valid_ref[i, s] == 1)
    def _():
        if xw_resident:
            start = pl.multiple_of(cols_ref[i, s] * tk, tk)
            xw_tile = xw_ref[pl.ds(start, tk), :]
        else:
            xw_tile = xw_ref[...]
        acc_ref[...] += jnp.dot(a_ref[...], xw_tile,
                                preferred_element_type=jnp.float32)

    @pl.when(s == pl.num_programs(1) - 1)
    def _():
        out = acc_ref[...]
        if relu:
            out = jnp.maximum(out, 0.0)
        if fuse_w2:
            # fused layer-2 feature transform rides in the MXU slack
            out = jnp.dot(out.astype(jnp.bfloat16), w2_ref[...],
                          preferred_element_type=jnp.float32)
        o_ref[...] = out.astype(o_ref.dtype)


def _propagate(a, xw, b, w2, cols, valid, max_c, *, tm, tk, relu, out_dtype, budget):
    n_pad = a.shape[0]
    h = xw.shape[1]
    fuse_w2 = w2 is not None
    out_cols = w2.shape[1] if fuse_w2 else h
    out_bytes = jnp.dtype(out_dtype).itemsize

    # VMEM estimate for everything except XW (count double buffers).
    est_rest = (2 * tm * tk * 2                      # A tiles
                + tm * h * 4                         # f32 accumulator
                + 2 * tm * out_cols * out_bytes      # output tiles
                + (2 * h * out_cols * 2 if fuse_w2 else 0)
                + 2 * h * 4 + (2 << 20))             # bias + slack
    xw_resident = (est_rest + 2 * n_pad * h * 2) <= int(0.85 * budget)

    kernel = functools.partial(_prop_kernel, tk=tk, xw_resident=xw_resident,
                               relu=relu, fuse_w2=fuse_w2)

    if xw_resident:
        xw_spec = pl.BlockSpec((n_pad, h), lambda i, s, c, v: (0, 0))
    else:
        xw_spec = pl.BlockSpec((tk, h), lambda i, s, c, v: (c[i, s], 0))

    in_specs = [
        pl.BlockSpec((tm, tk), lambda i, s, c, v: (i, c[i, s])),  # A nonzero block
        xw_spec,
        pl.BlockSpec((1, h), lambda i, s, c, v: (0, 0)),          # bias
    ]
    args = [a, xw, b]
    if fuse_w2:
        in_specs.append(pl.BlockSpec((h, out_cols), lambda i, s, c, v: (0, 0)))
        args.append(w2)

    return pl.pallas_call(
        kernel,
        out_shape=jax.ShapeDtypeStruct((n_pad, out_cols), out_dtype),
        grid_spec=pltpu.PrefetchScalarGridSpec(
            num_scalar_prefetch=2,
            grid=(n_pad // tm, max_c),
            in_specs=in_specs,
            out_specs=pl.BlockSpec((tm, out_cols), lambda i, s, c, v: (i, 0)),
            scratch_shapes=[pltpu.VMEM((tm, h), jnp.float32)],
        ),
        compiler_params=pltpu.CompilerParams(
            dimension_semantics=("parallel", "arbitrary"),
            vmem_limit_bytes=budget,
        ),
    )(cols, valid, *args)


# ----------------------------------------------------------------------------
# full forward:  out = A_hat @ (relu(A_hat @ (X W1) + b1) W2) + b2
# ----------------------------------------------------------------------------
def gcn_forward_pallas(a_hat, x, w1, b1, w2, b2, *, force_tiled=False):
    """Eager-only wrapper (block-sparse schedule needs concrete A_hat)."""
    n, f = x.shape
    h = w1.shape[1]
    c = w2.shape[1]
    h_pad = _round_up(h, LANE)
    c_pad = _round_up(c, LANE)
    budget = _vmem_budget_bytes()

    def pad_params(n_pad):
        a_p = _pad_to(a_hat, (n_pad, n_pad), jnp.bfloat16)
        x_p = _pad_to(x, (n_pad, f), jnp.bfloat16)
        w1_p = _pad_to(w1, (f, h_pad), jnp.bfloat16)
        w2_p = _pad_to(w2, (h_pad, c_pad), jnp.bfloat16)
        b1_p = _pad_to(b1.reshape(1, -1), (1, h_pad), jnp.float32)
        b2_p = _pad_to(b2.reshape(1, -1), (1, c_pad), jnp.float32)
        return a_p, x_p, w1_p, b1_p, w2_p, b2_p

    # ---- small-graph fast path: everything resident, single kernel launch
    n_pad128 = _round_up(n, LANE)
    fast_bytes = 2 * n_pad128 * n_pad128 * 2 + 12 * n_pad128 * max(h_pad, c_pad) * 4
    if (not force_tiled) and n_pad128 <= 2048 and fast_bytes <= budget // 2:
        a_p, x_p, w1_p, b1_p, w2_p, b2_p = pad_params(n_pad128)
        out = _fused_small(a_p, x_p, w1_p, b1_p, w2_p, b2_p, budget)
        return out[:n, :c]

    # ---- tiled, block-sparse path
    tm = _pick_tile(n)
    tk = tm
    n_pad = _round_up(n, tm)
    a_p, x_p, w1_p, b1_p, w2_p, b2_p = pad_params(n_pad)

    cols, valid, max_c = _block_schedule(a_p, tm, tk)

    # layer 1 feature transform
    xw1 = _xw_matmul(x_p, w1_p, tm, budget)                         # (N, Hp) bf16
    # layer 1 propagation with fused relu + H1 @ W2 epilogue -> XW2 directly
    xw2 = _propagate(a_p, xw1, b1_p, w2_p, cols, valid, max_c,
                     tm=tm, tk=tk, relu=True, out_dtype=jnp.bfloat16,
                     budget=budget)                                 # (N, Cp) bf16
    # TODO(synk): F.dropout(p=0.5, training=True) not emitted; eval-mode
    # identity (training-mode dropout would have to act on H1 before @W2).
    # layer 2 propagation
    out = _propagate(a_p, xw2, b2_p, None, cols, valid, max_c,
                     tm=tm, tk=tk, relu=False, out_dtype=jnp.float32,
                     budget=budget)                                 # (N, Cp) f32
    return out[:n, :c]


# ----------------------------------------------------------------------------
# glue: dense symmetrically-normalized adjacency (PyG gcn_norm,
# improved=False, add_self_loops=False) + glorot init + f32 reference.
# ----------------------------------------------------------------------------
def build_normalized_adjacency(edge_index, num_nodes):
    row, col = edge_index[0], edge_index[1]           # source, target
    ew = jnp.ones(row.shape[0], dtype=jnp.float32)
    deg = jnp.zeros((num_nodes,), jnp.float32).at[col].add(ew)   # in-degree
    deg_inv_sqrt = jnp.where(deg > 0, jax.lax.rsqrt(jnp.maximum(deg, 1.0)), 0.0)
    norm = deg_inv_sqrt[row] * deg_inv_sqrt[col]
    a_hat = jnp.zeros((num_nodes, num_nodes), jnp.float32)
    # out[target] += norm * x[source]  =>  A_hat[target, source] = norm
    a_hat = a_hat.at[col, row].add(norm)
    return a_hat


def glorot(key, shape):
    fan_in, fan_out = shape
    limit = jnp.sqrt(6.0 / (fan_in + fan_out))
    return jax.random.uniform(key, shape, jnp.float32, -limit, limit)


def gcn_reference(a_hat, x, w1, b1, w2, b2):
    """f32 reference emulating the kernels' bf16 operand rounding."""
    hi = jax.lax.Precision.HIGHEST
    bf = lambda t: t.astype(jnp.bfloat16).astype(jnp.float32)
    a = bf(a_hat)
    xw1 = bf(jnp.dot(bf(x), bf(w1), precision=hi))
    h = bf(jnp.maximum(jnp.dot(a, xw1, precision=hi) + b1.reshape(1, -1), 0.0))
    xw2 = bf(jnp.dot(h, bf(w2), precision=hi))
    return jnp.dot(a, xw2, precision=hi) + b2.reshape(1, -1)


if __name__ == "__main__":
    def make_problem(key, n, f_in, hidden, n_cls, e, n_active=None):
        kx, ks, kd, kw1, kw2, kb1, kb2 = jax.random.split(key, 7)
        n_act = n if n_active is None else n_active
        x = jax.random.normal(kx, (n, f_in), jnp.float32)
        edge_index = jnp.stack([
            jax.random.randint(ks, (e,), 0, n_act),
            jax.random.randint(kd, (e,), 0, n_act),
        ]).astype(jnp.int32)
        w1 = glorot(kw1, (f_in, hidden))
        w2 = glorot(kw2, (hidden, n_cls))
        b1 = 0.1 * jax.random.normal(kb1, (hidden,), jnp.float32)
        b2 = 0.1 * jax.random.normal(kb2, (n_cls,), jnp.float32)
        a_hat = build_normalized_adjacency(edge_index, n)
        return a_hat, x, w1, b1, w2, b2

    key = jax.random.PRNGKey(0)
    k1, k2 = jax.random.split(key)

    # 1) small graph (N=128, F=32, H=32, C=51) -> single-kernel fast path
    args = make_problem(k1, 128, 32, 32, 51, 512)
    out = jax.block_until_ready(gcn_forward_pallas(*args))
    ref = gcn_reference(*args)
    assert out.shape == (128, 51)
    assert jnp.allclose(out, ref, atol=2e-2, rtol=2e-2), "fast path mismatch"

    # 2) force the tiled block-sparse path (edges only among first 200 of 300
    #    nodes -> some all-zero A blocks exercise the skip/schedule logic).
    args = make_problem(k2, 300, 32, 32, 51, 1500, n_active=200)
    out = jax.block_until_ready(gcn_forward_pallas(*args, force_tiled=True))
    ref = gcn_reference(*args)
    assert out.shape == (300, 51)
    assert jnp.allclose(out, ref, atol=2e-2, rtol=2e-2), "tiled path mismatch"

    print("KERNEL_OK")
</pallas_src>

<mosaic_0001>
module attributes {stable_mosaic.version = 11 : i64} {
  func.func @_fused_small_kernel(%arg0: i32, %arg1: memref<128x128xbf16, #tpu.memory_space<vmem>>, %arg2: memref<128x32xbf16, #tpu.memory_space<vmem>>, %arg3: memref<32x128xbf16, #tpu.memory_space<vmem>>, %arg4: memref<1x128xf32, #tpu.memory_space<vmem>>, %arg5: memref<128x128xbf16, #tpu.memory_space<vmem>>, %arg6: memref<1x128xf32, #tpu.memory_space<vmem>>, %arg7: memref<128x128xf32, #tpu.memory_space<vmem>>) attributes {dimension_semantics = [#tpu.dimension_semantics<arbitrary>], iteration_bounds = array<i64: 1>, scalar_prefetch = 0 : i64, scratch_operands = 0 : i64, tpu.core_type = #tpu.core_type<tc>, window_params = [{pipeline_mode = #tpu.pipeline_mode<synchronous>, transform_indices = @transform_0, window_bounds = array<i64: 128, 128>}, {pipeline_mode = #tpu.pipeline_mode<synchronous>, transform_indices = @transform_1, window_bounds = array<i64: 128, 32>}, {pipeline_mode = #tpu.pipeline_mode<synchronous>, transform_indices = @transform_2, window_bounds = array<i64: 32, 128>}, {pipeline_mode = #tpu.pipeline_mode<synchronous>, transform_indices = @transform_3, window_bounds = array<i64: 1, 128>}, {pipeline_mode = #tpu.pipeline_mode<synchronous>, transform_indices = @transform_4, window_bounds = array<i64: 128, 128>}, {pipeline_mode = #tpu.pipeline_mode<synchronous>, transform_indices = @transform_5, window_bounds = array<i64: 1, 128>}, {pipeline_mode = #tpu.pipeline_mode<synchronous>, transform_indices = @transform_6, window_bounds = array<i64: 128, 128>}]} {
    %c0 = arith.constant 0 : index
    %c0_0 = arith.constant 0 : index
    %0 = vector.load %arg2[%c0, %c0_0] : memref<128x32xbf16, #tpu.memory_space<vmem>>, vector<128x32xbf16>
    %c0_1 = arith.constant 0 : index
    %c0_2 = arith.constant 0 : index
    %1 = vector.load %arg3[%c0_1, %c0_2] : memref<32x128xbf16, #tpu.memory_space<vmem>>, vector<32x128xbf16>
    %cst = arith.constant dense<0.000000e+00> : vector<128x128xf32>
    %2 = tpu.matmul %0, %1, %cst {dimension_numbers = #tpu.dot_dimension_numbers<[1], [0], [0], [1], [0, 0, 1, 1], [], []>} : vector<128x32xbf16>, vector<32x128xbf16>, vector<128x128xf32> -> vector<128x128xf32>
    %3 = arith.truncf %2 : vector<128x128xf32> to vector<128x128xbf16>
    %c0_3 = arith.constant 0 : index
    %c0_4 = arith.constant 0 : index
    %4 = vector.load %arg1[%c0_3, %c0_4] : memref<128x128xbf16, #tpu.memory_space<vmem>>, vector<128x128xbf16>
    %cst_5 = arith.constant dense<0.000000e+00> : vector<128x128xf32>
    %5 = tpu.matmul %4, %3, %cst_5 {dimension_numbers = #tpu.dot_dimension_numbers<[1], [0], [0], [1], [0, 0, 1, 1], [], []>} : vector<128x128xbf16>, vector<128x128xbf16>, vector<128x128xf32> -> vector<128x128xf32>
    %c0_6 = arith.constant 0 : index
    %c0_7 = arith.constant 0 : index
    %6 = vector.load %arg4[%c0_6, %c0_7] : memref<1x128xf32, #tpu.memory_space<vmem>>, vector<1x128xf32>
    %7 = vector.broadcast %6 : vector<1x128xf32> to vector<128x128xf32>
    %8 = arith.addf %5, %7 : vector<128x128xf32>
    %cst_8 = arith.constant 0.000000e+00 : f32
    %9 = vector.broadcast %cst_8 : f32 to vector<128x128xf32>
    %10 = arith.maximumf %8, %9 : vector<128x128xf32>
    %11 = arith.truncf %10 : vector<128x128xf32> to vector<128x128xbf16>
    %c0_9 = arith.constant 0 : index
    %c0_10 = arith.constant 0 : index
    %12 = vector.load %arg5[%c0_9, %c0_10] : memref<128x128xbf16, #tpu.memory_space<vmem>>, vector<128x128xbf16>
    %cst_11 = arith.constant dense<0.000000e+00> : vector<128x128xf32>
    %13 = tpu.matmul %11, %12, %cst_11 {dimension_numbers = #tpu.dot_dimension_numbers<[1], [0], [0], [1], [0, 0, 1, 1], [], []>} : vector<128x128xbf16>, vector<128x128xbf16>, vector<128x128xf32> -> vector<128x128xf32>
    %14 = arith.truncf %13 : vector<128x128xf32> to vector<128x128xbf16>
    %c0_12 = arith.constant 0 : index
    %c0_13 = arith.constant 0 : index
    %15 = vector.load %arg1[%c0_12, %c0_13] : memref<128x128xbf16, #tpu.memory_space<vmem>>, vector<128x128xbf16>
    %cst_14 = arith.constant dense<0.000000e+00> : vector<128x128xf32>
    %16 = tpu.matmul %15, %14, %cst_14 {dimension_numbers = #tpu.dot_dimension_numbers<[1], [0], [0], [1], [0, 0, 1, 1], [], []>} : vector<128x128xbf16>, vector<128x128xbf16>, vector<128x128xf32> -> vector<128x128xf32>
    %c0_15 = arith.constant 0 : index
    %c0_16 = arith.constant 0 : index
    %17 = vector.load %arg6[%c0_15, %c0_16] : memref<1x128xf32, #tpu.memory_space<vmem>>, vector<1x128xf32>
    %18 = vector.broadcast %17 : vector<1x128xf32> to vector<128x128xf32>
    %19 = arith.addf %16, %18 : vector<128x128xf32>
    %c0_17 = arith.constant 0 : index
    %c0_18 = arith.constant 0 : index
    %20 = vector.load %arg7[%c0_17, %c0_18] : memref<128x128xf32, #tpu.memory_space<vmem>>, vector<128x128xf32>
    tpu.vector_store %arg7[%c0_17, %c0_18], %19 {strides = array<i32>} : memref<128x128xf32, #tpu.memory_space<vmem>>, vector<128x128xf32>,
    return
  }
  func.func @transform_0(%arg0: i32) -> (i32, i32) {
    %c0_i32 = arith.constant 0 : i32
    %c0_i32_0 = arith.constant 0 : i32
    %c0_i32_1 = arith.constant 0 : i32
    return %c0_i32, %c0_i32_0 : i32, i32
  }
  func.func @transform_1(%arg0: i32) -> (i32, i32) {
    %c0_i32 = arith.constant 0 : i32
    %c0_i32_0 = arith.constant 0 : i32
    %c0_i32_1 = arith.constant 0 : i32
    return %c0_i32, %c0_i32_0 : i32, i32
  }
  func.func @transform_2(%arg0: i32) -> (i32, i32) {
    %c0_i32 = arith.constant 0 : i32
    %c0_i32_0 = arith.constant 0 : i32
    %c0_i32_1 = arith.constant 0 : i32
    return %c0_i32, %c0_i32_0 : i32, i32
  }
  func.func @transform_3(%arg0: i32) -> (i32, i32) {
    %c0_i32 = arith.constant 0 : i32
    %c0_i32_0 = arith.constant 0 : i32
    %c0_i32_1 = arith.constant 0 : i32
    return %c0_i32, %c0_i32_0 : i32, i32
  }
  func.func @transform_4(%arg0: i32) -> (i32, i32) {
    %c0_i32 = arith.constant 0 : i32
    %c0_i32_0 = arith.constant 0 : i32
    %c0_i32_1 = arith.constant 0 : i32
    return %c0_i32, %c0_i32_0 : i32, i32
  }
  func.func @transform_5(%arg0: i32) -> (i32, i32) {
    %c0_i32 = arith.constant 0 : i32
    %c0_i32_0 = arith.constant 0 : i32
    %c0_i32_1 = arith.constant 0 : i32
    return %c0_i32, %c0_i32_0 : i32, i32
  }
  func.func @transform_6(%arg0: i32) -> (i32, i32) {
    %c0_i32 = arith.constant 0 : i32
    %c0_i32_0 = arith.constant 0 : i32
    %c0_i32_1 = arith.constant 0 : i32
    return %c0_i32, %c0_i32_0 : i32, i32
  }
}

</mosaic_0001>

<llo_original>
// kernel: tpu_custom_call.1
$region0: #{tpu_custom_call.1}
  #allocation0 [shape = 'u32[]', space=smem, size = 0x4, offset = 0x4, fixed_abs, tag = 'smem constant byte address 0x4 - core index']
  #allocation1 [shape = 'u32[144,128]{1,0:T(1,128)}', space=vmem, size = 0x12000, scoped, tag = 'internal scratch']
  %s0 = inlined_call_operand.vmem [shape: bf16[128,128], index: 0, kind: input, shape index: {}]
  %s1 = inlined_call_operand.vmem [shape: bf16[128,32], index: 1, kind: input, shape index: {}]
  %s2 = inlined_call_operand.vmem [shape: bf16[32,128], index: 2, kind: input, shape index: {}]
  %s3 = inlined_call_operand.vmem [shape: f32[1,128], index: 3, kind: input, shape index: {}]
  %s4 = inlined_call_operand.hbm [shape: bf16[128,128], index: 4, kind: input, shape index: {}]
  %s5 = inlined_call_operand.vmem [shape: f32[1,128], index: 5, kind: input, shape index: {}]
  %s6 = inlined_call_operand.hbm [shape: f32[128,128], index: 6, kind: output, shape index: {}]
  %s7 = sld [smem:[#allocation0]]
  $region38: #{tpu_custom_call.1} parent=0
    _
  %s9 = ssub.s32 1, %s7
  %s10 = scalar_select 0, %s9, %s7
  $region1: #{tpu_custom_call.1} parent=0
    #allocation2 [shape = 'u8[32768]{0}', space=vmem, size = 0x8000, scoped, tag = 'input window, operand 4, single buffered']
    #allocation3 [shape = 's32[1]{0}', space=sflag, size = 0x4, scoped, tag = 'scoped memory for tpu_custom_call.1']
    #allocation4 [shape = 's32[1]{0}', space=sflag, size = 0x4, scoped, tag = 'scoped memory for tpu_custom_call.1']
    #allocation5 [shape = 'u8[65536]{0}', space=vmem, size = 0x10000, scoped, tag = 'output window, operand 0, single buffered']
    %11 = vsyncpa [#allocation3], 0
    %12 = vsyncpa [#allocation4], 0
    // Predicated region
    $region2: #{tpu_custom_call.1} parent=1 // pred_check
      _
    $region3: #{tpu_custom_call.1} parent=1 // pred_check_branch
      %14 = sbr.rel (0) target = $region5
    $region4: #{tpu_custom_call.1} parent=1 // pred_region
      _
    $region5: #{tpu_custom_call.1} parent=1 // pred_fallthru
      _
    // Predicated region
    $region6: #{tpu_custom_call.1} parent=1 // pred_check
      _
    $region7: #{tpu_custom_call.1} parent=1 // pred_check_branch
      %16 = sbr.rel (0) target = $region9
    $region8: #{tpu_custom_call.1} parent=1 // pred_region
      _
    $region9: #{tpu_custom_call.1} parent=1 // pred_fallthru
      _
    // Predicated region
    $region10: #{tpu_custom_call.1} parent=1 // pred_check
      _
    $region11: #{tpu_custom_call.1} parent=1 // pred_check_branch
      %18 = sbr.rel (0) target = $region13
    $region12: #{tpu_custom_call.1} parent=1 // pred_region
      _
    $region13: #{tpu_custom_call.1} parent=1 // pred_fallthru
      _
    // Predicated region
    $region14: #{tpu_custom_call.1} parent=1 // pred_check
      _
    $region15: #{tpu_custom_call.1} parent=1 // pred_check_branch
      %20 = sbr.rel (0) target = $region17
    $region16: #{tpu_custom_call.1} parent=1 // pred_region
      _
    $region17: #{tpu_custom_call.1} parent=1 // pred_fallthru
      _
    // Predicated region
    $region18: #{tpu_custom_call.1} parent=1 // pred_check
      _
    $region19: #{tpu_custom_call.1} parent=1 // pred_check_branch
      %22 = sbr.rel (0) target = $region21
    $region20: #{tpu_custom_call.1} parent=1 // pred_region
      %s24 = ssub.s32 1024, 1024
      %25 = vsyncadd [#allocation3], %s24
      %s26 = sshll.u32 [#allocation2], 4
      %s27 = int_to_ptr.vmem [resolvable:$true] %s26
      %32 = dma.hbm_to_vmem [thread:$0]  %s4, 1024, %s27, [#allocation3], 64, 64, 4
    $region21: #{tpu_custom_call.1} parent=1 // pred_fallthru
      _
    // Predicated region
    $region22: #{tpu_custom_call.1} parent=1 // pred_check
      _
    $region23: #{tpu_custom_call.1} parent=1 // pred_check_branch
      %34 = sbr.rel (0) target = $region25
    $region24: #{tpu_custom_call.1} parent=1 // pred_region
      _
    $region25: #{tpu_custom_call.1} parent=1 // pred_fallthru
      _
    // Predicated region
    $region26: #{tpu_custom_call.1} parent=1 // pred_check
      _
    $region27: #{tpu_custom_call.1} parent=1 // pred_check_branch
      %36 = sbr.rel (0) target = $region29
    $region28: #{tpu_custom_call.1} parent=1 // pred_region
      %37 = dma.done [#allocation3], 1024
    $region29: #{tpu_custom_call.1} parent=1 // pred_fallthru
      _
    %v39 = vld [vmem:[%s1] sm:$0xf]
    %v40 = vld [vmem:[%s1 + $0x4] sm:$0xf]
    %v41 = vld [vmem:[%s1 + $0x8] sm:$0xf]
    %v42 = vld [vmem:[%s1 + $0xc] sm:$0xf]
    %v43 = vld [vmem:[%s1 + $0x10] sm:$0xf]
    %v44 = vld [vmem:[%s1 + $0x14] sm:$0xf]
    %v45 = vld [vmem:[%s1 + $0x18] sm:$0xf]
    %v46 = vld [vmem:[%s1 + $0x1c] sm:$0xf]
    %v47 = vld [vmem:[%s1 + $0x20] sm:$0xf]
    %v48 = vld [vmem:[%s1 + $0x24] sm:$0xf]
    %v49 = vld [vmem:[%s1 + $0x28] sm:$0xf]
    %v50 = vld [vmem:[%s1 + $0x2c] sm:$0xf]
    %v51 = vld [vmem:[%s1 + $0x30] sm:$0xf]
    %v52 = vld [vmem:[%s1 + $0x34] sm:$0xf]
    %v53 = vld [vmem:[%s1 + $0x38] sm:$0xf]
    %v54 = vld [vmem:[%s1 + $0x3c] sm:$0xf]
    %v55 = vld [vmem:[%s2] sm:$0xf]
    %v56 = vld [vmem:[%s2 + $0x4] sm:$0xf]
    %v57 = vld [vmem:[%s2 + $0x8] sm:$0xf]
    %v58 = vld [vmem:[%s2 + $0xc] sm:$0xf]
    %v75 = vunpack.c.l.b16 %v39
    %v76 = vunpack.c.l.b16 %v40
    %v77 = vunpack.c.l.b16 %v41
    %v78 = vunpack.c.l.b16 %v42
    %v79 = vunpack.c.l.b16 %v43
    %v80 = vunpack.c.l.b16 %v44
    %v81 = vunpack.c.l.b16 %v45
    %v82 = vunpack.c.l.b16 %v46
    %v83 = vunpack.c.l.b16 %v47
    %v84 = vunpack.c.l.b16 %v48
    %v85 = vunpack.c.l.b16 %v49
    %v86 = vunpack.c.l.b16 %v50
    %v87 = vunpack.c.l.b16 %v51
    %v88 = vunpack.c.l.b16 %v52
    %v89 = vunpack.c.l.b16 %v53
    %v90 = vunpack.c.l.b16 %v54
    %v91 = vpack.c.b16 %v76, %v75
    %v92 = vpack.c.b16 %v78, %v77
    %v93 = vpack.c.b16 %v80, %v79
    %v94 = vpack.c.b16 %v82, %v81
    %v95 = vpack.c.b16 %v84, %v83
    %v96 = vpack.c.b16 %v86, %v85
    %v97 = vpack.c.b16 %v88, %v87
    %v98 = vpack.c.b16 %v90, %v89
    %v103 = vunpack.c.l.b16 %v55
    %v104 = vunpack.c.l.b16 %v56
    %v105 = vunpack.c.l.b16 %v57
    %v106 = vunpack.c.l.b16 %v58
    %v107 = vpack.c.b16 %v104, %v103
    %v108 = vpack.c.b16 %v106, %v105
    %vm111 = vcmask 261120
    %v113 = vsel %vm111, %v91, 0
    %v116 = vsel %vm111, %v92, 0
    %v119 = vsel %vm111, %v93, 0
    %v122 = vsel %vm111, %v94, 0
    %v125 = vsel %vm111, %v95, 0
    %v128 = vsel %vm111, %v96, 0
    %v131 = vsel %vm111, %v97, 0
    %v134 = vsel %vm111, %v98, 0
    %136 = vmatprep.subr.bf16.mxu0 0
    %137 = vmatpush1.bf16.msra.mxu0 0
    %138 = vmatprep.subr.bf16.mxu0 0
    %139 = vmatpush1.bf16.msra.mxu0 0
    %140 = vmatprep.subr.bf16.mxu0 0
    %141 = vmatpush1.bf16.msra.mxu0 0
    %142 = vmatprep.subr.bf16.mxu0 0
    %143 = vmatpush1.bf16.msra.mxu0 0
    %144 = vmatprep.subr.bf16.mxu0 0
    %145 = vmatpush1.bf16.msra.mxu0 0
    %146 = vmatprep.subr.bf16.mxu0 0
    %147 = vmatpush1.bf16.msra.mxu0 0
    %148 = vmatprep.subr.bf16.mxu0 0
    %149 = vmatpush1.bf16.msra.mxu0 %v108
    %150 = vmatprep.subr.bf16.mxu0 0
    %151 = vmatpush1.bf16.msra.mxu0 %v107
    %152 = vmatprep.subr.bf16.mxu0 0
    %153 = vmatpush2.bf16.msra.mxu0 0
    %154 = vmatprep.subr.bf16.mxu0 0
    %155 = vmatpush2.bf16.msra.mxu0 0
    %156 = vmatprep.subr.bf16.mxu0 0
    %157 = vmatpush2.bf16.msra.mxu0 0
    %158 = vmatprep.subr.bf16.mxu0 0
    %159 = vmatpush2.bf16.msra.mxu0 0
    %160 = vmatprep.subr.bf16.mxu0 0
    %161 = vmatpush2.bf16.msra.mxu0 0
    %162 = vmatprep.subr.bf16.mxu0 0
    %163 = vmatpush2.bf16.msra.mxu0 0
    %164 = vmatprep.subr.bf16.mxu0 0
    %165 = vmatpush2.bf16.msra.mxu0 0
    %166 = vmatprep.subr.bf16.mxu0 0
    %167 = vmatpush2.bf16.msra.mxu0 0
    %168 = vmatprep.mubr.bf16.mxu0 0
    %169 = vmatmul.mubr.bf16.gmra.mxu0 %v113
    %v170 = vpop.f32.mrf.mxu0
    %v171 = vadd.f32 0.0, %v170
    %v172 = vpop.f32.mrf.mxu0
    %v173 = vpop.f32.mrf.mxu0
    %v174 = vadd.f32 0.0, %v173
    %v175 = vpop.f32.mrf.mxu0
    %176 = vmatprep.mubr.bf16.mxu0 0
    %177 = vmatmul.mubr.bf16.gmra.mxu0 %v116
    %v178 = vpop.f32.mrf.mxu0
    %v179 = vadd.f32 0.0, %v178
    %v180 = vpop.f32.mrf.mxu0
    %v181 = vpop.f32.mrf.mxu0
    %v182 = vadd.f32 0.0, %v181
    %v183 = vpop.f32.mrf.mxu0
    %184 = vmatprep.mubr.bf16.mxu0 0
    %185 = vmatmul.mubr.bf16.gmra.mxu0 %v119
    %v186 = vpop.f32.mrf.mxu0
    %v187 = vadd.f32 0.0, %v186
    %v188 = vpop.f32.mrf.mxu0
    %v189 = vpop.f32.mrf.mxu0
    %v190 = vadd.f32 0.0, %v189
    %v191 = vpop.f32.mrf.mxu0
    %192 = vmatprep.mubr.bf16.mxu0 0
    %193 = vmatmul.mubr.bf16.gmra.mxu0 %v122
    %v194 = vpop.f32.mrf.mxu0
    %v195 = vadd.f32 0.0, %v194
    %v196 = vpop.f32.mrf.mxu0
    %v197 = vpop.f32.mrf.mxu0
    %v198 = vadd.f32 0.0, %v197
    %v199 = vpop.f32.mrf.mxu0
    %200 = vmatprep.mubr.bf16.mxu0 0
    %201 = vmatmul.mubr.bf16.gmra.mxu0 %v125
    %v202 = vpop.f32.mrf.mxu0
    %v203 = vadd.f32 0.0, %v202
    %v204 = vpop.f32.mrf.mxu0
    %v205 = vpop.f32.mrf.mxu0
    %v206 = vadd.f32 0.0, %v205
    %v207 = vpop.f32.mrf.mxu0
    %208 = vmatprep.mubr.bf16.mxu0 0
    %209 = vmatmul.mubr.bf16.gmra.mxu0 %v128
    %v210 = vpop.f32.mrf.mxu0
    %v211 = vadd.f32 0.0, %v210
    %v212 = vpop.f32.mrf.mxu0
    %v213 = vpop.f32.mrf.mxu0
    %v214 = vadd.f32 0.0, %v213
    %v215 = vpop.f32.mrf.mxu0
    %216 = vmatprep.mubr.bf16.mxu0 0
    %217 = vmatmul.mubr.bf16.gmra.mxu0 %v131
    %v218 = vpop.f32.mrf.mxu0
    %v219 = vadd.f32 0.0, %v218
    %v220 = vpop.f32.mrf.mxu0
    %v221 = vpop.f32.mrf.mxu0
    %v222 = vadd.f32 0.0, %v221
    %v223 = vpop.f32.mrf.mxu0
    %224 = vmatprep.mubr.bf16.mxu0 0
    %225 = vmatmul.mubr.bf16.gmra.mxu0 %v134
    %v226 = vpop.f32.mrf.mxu0
    %v227 = vadd.f32 0.0, %v226
    %v228 = vpop.f32.mrf.mxu0
    %v229 = vpop.f32.mrf.mxu0
    %v230 = vadd.f32 0.0, %v229
    %v231 = vpop.f32.mrf.mxu0
    %232 = vdwg.mxu0
    %v233 = vpack.c.bf16 %v174, %v171
    %v234 = vpack.c.bf16 %v182, %v179
    %v235 = vpack.c.bf16 %v190, %v187
    %v236 = vpack.c.bf16 %v198, %v195
    %v237 = vpack.c.bf16 %v206, %v203
    %v238 = vpack.c.bf16 %v214, %v211
    %v239 = vpack.c.bf16 %v222, %v219
    %v240 = vpack.c.bf16 %v230, %v227
    %v241 = vld [vmem:[%s0] sm:$0xf]
    %v242 = vld [vmem:[%s0 + $0x4] sm:$0xf]
    %v243 = vld [vmem:[%s0 + $0x8] sm:$0xf]
    %v244 = vld [vmem:[%s0 + $0xc] sm:$0xf]
    %v245 = vld [vmem:[%s0 + $0x10] sm:$0xf]
    %v246 = vld [vmem:[%s0 + $0x14] sm:$0xf]
    %v247 = vld [vmem:[%s0 + $0x18] sm:$0xf]
    %v248 = vld [vmem:[%s0 + $0x1c] sm:$0xf]
    %v249 = vld [vmem:[%s0 + $0x20] sm:$0xf]
    %v250 = vld [vmem:[%s0 + $0x24] sm:$0xf]
    %v251 = vld [vmem:[%s0 + $0x28] sm:$0xf]
    %v252 = vld [vmem:[%s0 + $0x2c] sm:$0xf]
    %v253 = vld [vmem:[%s0 + $0x30] sm:$0xf]
    %v254 = vld [vmem:[%s0 + $0x34] sm:$0xf]
    %v255 = vld [vmem:[%s0 + $0x38] sm:$0xf]
    %v256 = vld [vmem:[%s0 + $0x3c] sm:$0xf]
    %v257 = vld [vmem:[%s3] sm:$0x1]
    %v259 = vlaneseq
    %v260 = vshrl.u32 %v259, 7
    %v261 = vsub.s32 0, %v260
    %v262 = vrot.slane %v257, %v261
    %v280 = vunpack.c.l.b16 %v241
    %v281 = vunpack.c.l.b16 %v242
    %v282 = vunpack.c.l.b16 %v243
    %v283 = vunpack.c.l.b16 %v244
    %v284 = vunpack.c.l.b16 %v245
    %v285 = vunpack.c.l.b16 %v246
    %v286 = vunpack.c.l.b16 %v247
    %v287 = vunpack.c.l.b16 %v248
    %v288 = vunpack.c.l.b16 %v249
    %v289 = vunpack.c.l.b16 %v250
    %v290 = vunpack.c.l.b16 %v251
    %v291 = vunpack.c.l.b16 %v252
    %v292 = vunpack.c.l.b16 %v253
    %v293 = vunpack.c.l.b16 %v254
    %v294 = vunpack.c.l.b16 %v255
    %v295 = vunpack.c.l.b16 %v256
    %v296 = vpack.c.b16 %v281, %v280
    %v297 = vpack.c.b16 %v283, %v282
    %v298 = vpack.c.b16 %v285, %v284
    %v299 = vpack.c.b16 %v287, %v286
    %v300 = vpack.c.b16 %v289, %v288
    %v301 = vpack.c.b16 %v291, %v290
    %v302 = vpack.c.b16 %v293, %v292
    %v303 = vpack.c.b16 %v295, %v294
    %312 = vmatprep.subr.bf16.mxu0 0
    %313 = vmatpush1.bf16.msra.mxu0 %v240
    %314 = vmatprep.subr.bf16.mxu0 0
    %315 = vmatpush1.bf16.msra.mxu0 %v239
    %316 = vmatprep.subr.bf16.mxu0 0
    %317 = vmatpush1.bf16.msra.mxu0 %v238
    %318 = vmatprep.subr.bf16.mxu0 0
    %319 = vmatpush1.bf16.msra.mxu0 %v237
    %320 = vmatprep.subr.bf16.mxu0 0
    %321 = vmatpush1.bf16.msra.mxu0 %v236
    %322 = vmatprep.subr.bf16.mxu0 0
    %323 = vmatpush1.bf16.msra.mxu0 %v235
    %324 = vmatprep.subr.bf16.mxu0 0
    %325 = vmatpush1.bf16.msra.mxu0 %v234
    %326 = vmatprep.subr.bf16.mxu0 0
    %327 = vmatpush1.bf16.msra.mxu0 %v233
    %328 = vmatprep.subr.bf16.mxu0 0
    %329 = vmatpush2.bf16.msra.mxu0 0
    %330 = vmatprep.subr.bf16.mxu0 0
    %331 = vmatpush2.bf16.msra.mxu0 0
    %332 = vmatprep.subr.bf16.mxu0 0
    %333 = vmatpush2.bf16.msra.mxu0 0
    %334 = vmatprep.subr.bf16.mxu0 0
    %335 = vmatpush2.bf16.msra.mxu0 0
    %336 = vmatprep.subr.bf16.mxu0 0
    %337 = vmatpush2.bf16.msra.mxu0 0
    %338 = vmatprep.subr.bf16.mxu0 0
    %339 = vmatpush2.bf16.msra.mxu0 0
    %340 = vmatprep.subr.bf16.mxu0 0
    %341 = vmatpush2.bf16.msra.mxu0 0
    %342 = vmatprep.subr.bf16.mxu0 0
    %343 = vmatpush2.bf16.msra.mxu0 0
    %344 = vmatprep.mubr.bf16.mxu0 0
    %345 = vmatmul.mubr.bf16.gmra.mxu0 %v296
    %v346 = vpop.f32.mrf.mxu0
    %v347 = vadd.f32 %v262, %v346
    %v348 = vpop.f32.mrf.mxu0
    %v349 = vpop.f32.mrf.mxu0
    %v350 = vadd.f32 %v262, %v349
    %v351 = vpop.f32.mrf.mxu0
    %352 = vmatprep.mubr.bf16.mxu0 0
    %353 = vmatmul.mubr.bf16.gmra.mxu0 %v297
    %v354 = vpop.f32.mrf.mxu0
    %v355 = vadd.f32 %v262, %v354
    %v356 = vpop.f32.mrf.mxu0
    %v357 = vpop.f32.mrf.mxu0
    %v358 = vadd.f32 %v262, %v357
    %v359 = vpop.f32.mrf.mxu0
    %360 = vmatprep.mubr.bf16.mxu0 0
    %361 = vmatmul.mubr.bf16.gmra.mxu0 %v298
    %v362 = vpop.f32.mrf.mxu0
    %v363 = vadd.f32 %v262, %v362
    %v364 = vpop.f32.mrf.mxu0
    %v365 = vpop.f32.mrf.mxu0
    %v366 = vadd.f32 %v262, %v365
    %v367 = vpop.f32.mrf.mxu0
    %368 = vmatprep.mubr.bf16.mxu0 0
    %369 = vmatmul.mubr.bf16.gmra.mxu0 %v299
    %v370 = vpop.f32.mrf.mxu0
    %v371 = vadd.f32 %v262, %v370
    %v372 = vpop.f32.mrf.mxu0
    %v373 = vpop.f32.mrf.mxu0
    %v374 = vadd.f32 %v262, %v373
    %v375 = vpop.f32.mrf.mxu0
    %376 = vmatprep.mubr.bf16.mxu0 0
    %377 = vmatmul.mubr.bf16.gmra.mxu0 %v300
    %v378 = vpop.f32.mrf.mxu0
    %v379 = vadd.f32 %v262, %v378
    %v380 = vpop.f32.mrf.mxu0
    %v381 = vpop.f32.mrf.mxu0
    %v382 = vadd.f32 %v262, %v381
    %v383 = vpop.f32.mrf.mxu0
    %384 = vmatprep.mubr.bf16.mxu0 0
    %385 = vmatmul.mubr.bf16.gmra.mxu0 %v301
    %v386 = vpop.f32.mrf.mxu0
    %v387 = vadd.f32 %v262, %v386
    %v388 = vpop.f32.mrf.mxu0
    %v389 = vpop.f32.mrf.mxu0
    %v390 = vadd.f32 %v262, %v389
    %v391 = vpop.f32.mrf.mxu0
    %392 = vmatprep.mubr.bf16.mxu0 0
    %393 = vmatmul.mubr.bf16.gmra.mxu0 %v302
    %v394 = vpop.f32.mrf.mxu0
    %v395 = vadd.f32 %v262, %v394
    %v396 = vpop.f32.mrf.mxu0
    %v397 = vpop.f32.mrf.mxu0
    %v398 = vadd.f32 %v262, %v397
    %v399 = vpop.f32.mrf.mxu0
    %400 = vmatprep.mubr.bf16.mxu0 0
    %401 = vmatmul.mubr.bf16.gmra.mxu0 %v303
    %v402 = vpop.f32.mrf.mxu0
    %v403 = vadd.f32 %v262, %v402
    %v404 = vpop.f32.mrf.mxu0
    %v405 = vpop.f32.mrf.mxu0
    %v406 = vadd.f32 %v262, %v405
    %v407 = vpop.f32.mrf.mxu0
    %408 = vdwg.mxu0
    %v409 = vmax.f32 %v347, 0.0
    %v410 = vmax.f32 %v350, 0.0
    %v411 = vmax.f32 %v355, 0.0
    %v412 = vmax.f32 %v358, 0.0
    %v413 = vmax.f32 %v363, 0.0
    %v414 = vmax.f32 %v366, 0.0
    %v415 = vmax.f32 %v371, 0.0
    %v416 = vmax.f32 %v374, 0.0
    %v417 = vmax.f32 %v379, 0.0
    %v418 = vmax.f32 %v382, 0.0
    %v419 = vmax.f32 %v387, 0.0
    %v420 = vmax.f32 %v390, 0.0
    %v421 = vmax.f32 %v395, 0.0
    %v422 = vmax.f32 %v398, 0.0
    %v423 = vmax.f32 %v403, 0.0
    %v424 = vmax.f32 %v406, 0.0
    %v425 = vpack.c.bf16 %v410, %v409
    %v426 = vpack.c.bf16 %v412, %v411
    %v427 = vpack.c.bf16 %v414, %v413
    %v428 = vpack.c.bf16 %v416, %v415
    %v429 = vpack.c.bf16 %v418, %v417
    %v430 = vpack.c.bf16 %v420, %v419
    %v431 = vpack.c.bf16 %v422, %v421
    %v432 = vpack.c.bf16 %v424, %v423
    %v433 = vld [vmem:[#allocation2] sm:$0xf]
    %v434 = vld [vmem:[#allocation2 + $0x4] sm:$0xf]
    %v435 = vld [vmem:[#allocation2 + $0x8] sm:$0xf]
    %v436 = vld [vmem:[#allocation2 + $0xc] sm:$0xf]
    %v437 = vld [vmem:[#allocation2 + $0x10] sm:$0xf]
    %v438 = vld [vmem:[#allocation2 + $0x14] sm:$0xf]
    %v439 = vld [vmem:[#allocation2 + $0x18] sm:$0xf]
    %v440 = vld [vmem:[#allocation2 + $0x1c] sm:$0xf]
    %v441 = vld [vmem:[#allocation2 + $0x20] sm:$0xf]
    %v442 = vld [vmem:[#allocation2 + $0x24] sm:$0xf]
    %v443 = vld [vmem:[#allocation2 + $0x28] sm:$0xf]
    %v444 = vld [vmem:[#allocation2 + $0x2c] sm:$0xf]
    %v445 = vld [vmem:[#allocation2 + $0x30] sm:$0xf]
    %v446 = vld [vmem:[#allocation2 + $0x34] sm:$0xf]
    %v447 = vld [vmem:[#allocation2 + $0x38] sm:$0xf]
    %v448 = vld [vmem:[#allocation2 + $0x3c] sm:$0xf]
    %v465 = vunpack.c.l.b16 %v433
    %v466 = vunpack.c.l.b16 %v434
    %v467 = vunpack.c.l.b16 %v435
    %v468 = vunpack.c.l.b16 %v436
    %v469 = vunpack.c.l.b16 %v437
    %v470 = vunpack.c.l.b16 %v438
    %v471 = vunpack.c.l.b16 %v439
    %v472 = vunpack.c.l.b16 %v440
    %v473 = vunpack.c.l.b16 %v441
    %v474 = vunpack.c.l.b16 %v442
    %v475 = vunpack.c.l.b16 %v443
    %v476 = vunpack.c.l.b16 %v444
    %v477 = vunpack.c.l.b16 %v445
    %v478 = vunpack.c.l.b16 %v446
    %v479 = vunpack.c.l.b16 %v447
    %v480 = vunpack.c.l.b16 %v448
    %v481 = vpack.c.b16 %v466, %v465
    %v482 = vpack.c.b16 %v468, %v467
    %v483 = vpack.c.b16 %v470, %v469
    %v484 = vpack.c.b16 %v472, %v471
    %v485 = vpack.c.b16 %v474, %v473
    %v486 = vpack.c.b16 %v476, %v475
    %v487 = vpack.c.b16 %v478, %v477
    %v488 = vpack.c.b16 %v480, %v479
    %497 = vmatprep.subr.bf16.mxu0 0
    %498 = vmatpush1.bf16.msra.mxu0 %v488
    %499 = vmatprep.subr.bf16.mxu0 0
    %500 = vmatpush1.bf16.msra.mxu0 %v487
    %501 = vmatprep.subr.bf16.mxu0 0
    %502 = vmatpush1.bf16.msra.mxu0 %v486
    %503 = vmatprep.subr.bf16.mxu0 0
    %504 = vmatpush1.bf16.msra.mxu0 %v485
    %505 = vmatprep.subr.bf16.mxu0 0
    %506 = vmatpush1.bf16.msra.mxu0 %v484
    %507 = vmatprep.subr.bf16.mxu0 0
    %508 = vmatpush1.bf16.msra.mxu0 %v483
    %509 = vmatprep.subr.bf16.mxu0 0
    %510 = vmatpush1.bf16.msra.mxu0 %v482
    %511 = vmatprep.subr.bf16.mxu0 0
    %512 = vmatpush1.bf16.msra.mxu0 %v481
    %513 = vmatprep.subr.bf16.mxu0 0
    %514 = vmatpush2.bf16.msra.mxu0 0
    %515 = vmatprep.subr.bf16.mxu0 0
    %516 = vmatpush2.bf16.msra.mxu0 0
    %517 = vmatprep.subr.bf16.mxu0 0
    %518 = vmatpush2.bf16.msra.mxu0 0
    %519 = vmatprep.subr.bf16.mxu0 0
    %520 = vmatpush2.bf16.msra.mxu0 0
    %521 = vmatprep.subr.bf16.mxu0 0
    %522 = vmatpush2.bf16.msra.mxu0 0
    %523 = vmatprep.subr.bf16.mxu0 0
    %524 = vmatpush2.bf16.msra.mxu0 0
    %525 = vmatprep.subr.bf16.mxu0 0
    %526 = vmatpush2.bf16.msra.mxu0 0
    %527 = vmatprep.subr.bf16.mxu0 0
    %528 = vmatpush2.bf16.msra.mxu0 0
    %529 = vmatprep.mubr.bf16.mxu0 0
    %530 = vmatmul.mubr.bf16.gmra.mxu0 %v425
    %v531 = vpop.f32.mrf.mxu0
    %v532 = vadd.f32 0.0, %v531
    %v533 = vpop.f32.mrf.mxu0
    %v534 = vpop.f32.mrf.mxu0
    %v535 = vadd.f32 0.0, %v534
    %v536 = vpop.f32.mrf.mxu0
    %537 = vmatprep.mubr.bf16.mxu0 0
    %538 = vmatmul.mubr.bf16.gmra.mxu0 %v426
    %v539 = vpop.f32.mrf.mxu0
    %v540 = vadd.f32 0.0, %v539
    %v541 = vpop.f32.mrf.mxu0
    %v542 = vpop.f32.mrf.mxu0
    %v543 = vadd.f32 0.0, %v542
    %v544 = vpop.f32.mrf.mxu0
    %545 = vmatprep.mubr.bf16.mxu0 0
    %546 = vmatmul.mubr.bf16.gmra.mxu0 %v427
    %v547 = vpop.f32.mrf.mxu0
    %v548 = vadd.f32 0.0, %v547
    %v549 = vpop.f32.mrf.mxu0
    %v550 = vpop.f32.mrf.mxu0
    %v551 = vadd.f32 0.0, %v550
    %v552 = vpop.f32.mrf.mxu0
    %553 = vmatprep.mubr.bf16.mxu0 0
    %554 = vmatmul.mubr.bf16.gmra.mxu0 %v428
    %v555 = vpop.f32.mrf.mxu0
    %v556 = vadd.f32 0.0, %v555
    %v557 = vpop.f32.mrf.mxu0
    %v558 = vpop.f32.mrf.mxu0
    %v559 = vadd.f32 0.0, %v558
    %v560 = vpop.f32.mrf.mxu0
    %561 = vmatprep.mubr.bf16.mxu0 0
    %562 = vmatmul.mubr.bf16.gmra.mxu0 %v429
    %v563 = vpop.f32.mrf.mxu0
    %v564 = vadd.f32 0.0, %v563
    %v565 = vpop.f32.mrf.mxu0
    %v566 = vpop.f32.mrf.mxu0
    %v567 = vadd.f32 0.0, %v566
    %v568 = vpop.f32.mrf.mxu0
    %569 = vmatprep.mubr.bf16.mxu0 0
    %570 = vmatmul.mubr.bf16.gmra.mxu0 %v430
    %v571 = vpop.f32.mrf.mxu0
    %v572 = vadd.f32 0.0, %v571
    %v573 = vpop.f32.mrf.mxu0
    %v574 = vpop.f32.mrf.mxu0
    %v575 = vadd.f32 0.0, %v574
    %v576 = vpop.f32.mrf.mxu0
    %577 = vmatprep.mubr.bf16.mxu0 0
    %578 = vmatmul.mubr.bf16.gmra.mxu0 %v431
    %v579 = vpop.f32.mrf.mxu0
    %v580 = vadd.f32 0.0, %v579
    %v581 = vpop.f32.mrf.mxu0
    %v582 = vpop.f32.mrf.mxu0
    %v583 = vadd.f32 0.0, %v582
    %v584 = vpop.f32.mrf.mxu0
    %585 = vmatprep.mubr.bf16.mxu0 0
    %586 = vmatmul.mubr.bf16.gmra.mxu0 %v432
    %v587 = vpop.f32.mrf.mxu0
    %v588 = vadd.f32 0.0, %v587
    %v589 = vpop.f32.mrf.mxu0
    %v590 = vpop.f32.mrf.mxu0
    %v591 = vadd.f32 0.0, %v590
    %v592 = vpop.f32.mrf.mxu0
    %593 = vdwg.mxu0
    %v594 = vpack.c.bf16 %v535, %v532
    %v595 = vpack.c.bf16 %v543, %v540
    %v596 = vpack.c.bf16 %v551, %v548
    %v597 = vpack.c.bf16 %v559, %v556
    %v598 = vpack.c.bf16 %v567, %v564
    %v599 = vpack.c.bf16 %v575, %v572
    %v600 = vpack.c.bf16 %v583, %v580
    %v601 = vpack.c.bf16 %v591, %v588
    %v602 = vld [vmem:[%s5] sm:$0x1]
    %v604 = vlaneseq
    %v605 = vshrl.u32 %v604, 7
    %v606 = vsub.s32 0, %v605
    %v607 = vrot.slane %v602, %v606
    %609 = vmatprep.subr.bf16.mxu0 0
    %610 = vmatpush1.bf16.msra.mxu0 %v601
    %611 = vmatprep.subr.bf16.mxu0 0
    %612 = vmatpush1.bf16.msra.mxu0 %v600
    %613 = vmatprep.subr.bf16.mxu0 0
    %614 = vmatpush1.bf16.msra.mxu0 %v599
    %615 = vmatprep.subr.bf16.mxu0 0
    %616 = vmatpush1.bf16.msra.mxu0 %v598
    %617 = vmatprep.subr.bf16.mxu0 0
    %618 = vmatpush1.bf16.msra.mxu0 %v597
    %619 = vmatprep.subr.bf16.mxu0 0
    %620 = vmatpush1.bf16.msra.mxu0 %v596
    %621 = vmatprep.subr.bf16.mxu0 0
    %622 = vmatpush1.bf16.msra.mxu0 %v595
    %623 = vmatprep.subr.bf16.mxu0 0
    %624 = vmatpush1.bf16.msra.mxu0 %v594
    %625 = vmatprep.subr.bf16.mxu0 0
    %626 = vmatpush2.bf16.msra.mxu0 0
    %627 = vmatprep.subr.bf16.mxu0 0
    %628 = vmatpush2.bf16.msra.mxu0 0
    %629 = vmatprep.subr.bf16.mxu0 0
    %630 = vmatpush2.bf16.msra.mxu0 0
    %631 = vmatprep.subr.bf16.mxu0 0
    %632 = vmatpush2.bf16.msra.mxu0 0
    %633 = vmatprep.subr.bf16.mxu0 0
    %634 = vmatpush2.bf16.msra.mxu0 0
    %635 = vmatprep.subr.bf16.mxu0 0
    %636 = vmatpush2.bf16.msra.mxu0 0
    %637 = vmatprep.subr.bf16.mxu0 0
    %638 = vmatpush2.bf16.msra.mxu0 0
    %639 = vmatprep.subr.bf16.mxu0 0
    %640 = vmatpush2.bf16.msra.mxu0 0
    %641 = vmatprep.mubr.bf16.mxu0 0
    %642 = vmatmul.mubr.bf16.gmra.mxu0 %v296
    %v643 = vpop.f32.mrf.mxu0
    %v644 = vadd.f32 %v607, %v643
    %v645 = vpop.f32.mrf.mxu0
    %v646 = vpop.f32.mrf.mxu0
    %v647 = vadd.f32 %v607, %v646
    %v648 = vpop.f32.mrf.mxu0
    %649 = vmatprep.mubr.bf16.mxu0 0
    %650 = vmatmul.mubr.bf16.gmra.mxu0 %v297
    %v651 = vpop.f32.mrf.mxu0
    %v652 = vadd.f32 %v607, %v651
    %v653 = vpop.f32.mrf.mxu0
    %v654 = vpop.f32.mrf.mxu0
    %v655 = vadd.f32 %v607, %v654
    %v656 = vpop.f32.mrf.mxu0
    %657 = vmatprep.mubr.bf16.mxu0 0
    %658 = vmatmul.mubr.bf16.gmra.mxu0 %v298
    %v659 = vpop.f32.mrf.mxu0
    %v660 = vadd.f32 %v607, %v659
    %v661 = vpop.f32.mrf.mxu0
    %v662 = vpop.f32.mrf.mxu0
    %v663 = vadd.f32 %v607, %v662
    %v664 = vpop.f32.mrf.mxu0
    %665 = vmatprep.mubr.bf16.mxu0 0
    %666 = vmatmul.mubr.bf16.gmra.mxu0 %v299
    %v667 = vpop.f32.mrf.mxu0
    %v668 = vadd.f32 %v607, %v667
    %v669 = vpop.f32.mrf.mxu0
    %v670 = vpop.f32.mrf.mxu0
    %v671 = vadd.f32 %v607, %v670
    %v672 = vpop.f32.mrf.mxu0
    %673 = vmatprep.mubr.bf16.mxu0 0
    %674 = vmatmul.mubr.bf16.gmra.mxu0 %v300
    %v675 = vpop.f32.mrf.mxu0
    %v676 = vadd.f32 %v607, %v675
    %v677 = vpop.f32.mrf.mxu0
    %v678 = vpop.f32.mrf.mxu0
    %v679 = vadd.f32 %v607, %v678
    %v680 = vpop.f32.mrf.mxu0
    %681 = vmatprep.mubr.bf16.mxu0 0
    %682 = vmatmul.mubr.bf16.gmra.mxu0 %v301
    %v683 = vpop.f32.mrf.mxu0
    %v684 = vadd.f32 %v607, %v683
    %v685 = vpop.f32.mrf.mxu0
    %v686 = vpop.f32.mrf.mxu0
    %v687 = vadd.f32 %v607, %v686
    %v688 = vpop.f32.mrf.mxu0
    %689 = vmatprep.mubr.bf16.mxu0 0
    %690 = vmatmul.mubr.bf16.gmra.mxu0 %v302
    %v691 = vpop.f32.mrf.mxu0
    %v692 = vadd.f32 %v607, %v691
    %v693 = vpop.f32.mrf.mxu0
    %v694 = vpop.f32.mrf.mxu0
    %v695 = vadd.f32 %v607, %v694
    %v696 = vpop.f32.mrf.mxu0
    %697 = vmatprep.mubr.bf16.mxu0 0
    %698 = vmatmul.mubr.bf16.gmra.mxu0 %v303
    %v699 = vpop.f32.mrf.mxu0
    %v700 = vadd.f32 %v607, %v699
    %v701 = vpop.f32.mrf.mxu0
    %v702 = vpop.f32.mrf.mxu0
    %v703 = vadd.f32 %v607, %v702
    %v704 = vpop.f32.mrf.mxu0
    %705 = vdwg.mxu0
    %706 = vst [vmem:[#allocation5] sm:$0xff] %v644
    %707 = vst [vmem:[#allocation5 + $0x8] sm:$0xff] %v647
    %708 = vst [vmem:[#allocation5 + $0x10] sm:$0xff] %v652
    %709 = vst [vmem:[#allocation5 + $0x18] sm:$0xff] %v655
    %710 = vst [vmem:[#allocation5 + $0x20] sm:$0xff] %v660
    %711 = vst [vmem:[#allocation5 + $0x28] sm:$0xff] %v663
    %712 = vst [vmem:[#allocation5 + $0x30] sm:$0xff] %v668
    %713 = vst [vmem:[#allocation5 + $0x38] sm:$0xff] %v671
    %714 = vst [vmem:[#allocation5 + $0x40] sm:$0xff] %v676
    %715 = vst [vmem:[#allocation5 + $0x48] sm:$0xff] %v679
    %716 = vst [vmem:[#allocation5 + $0x50] sm:$0xff] %v684
    %717 = vst [vmem:[#allocation5 + $0x58] sm:$0xff] %v687
    %718 = vst [vmem:[#allocation5 + $0x60] sm:$0xff] %v692
    %719 = vst [vmem:[#allocation5 + $0x68] sm:$0xff] %v695
    %720 = vst [vmem:[#allocation5 + $0x70] sm:$0xff] %v700
    %721 = vst [vmem:[#allocation5 + $0x78] sm:$0xff] %v703
    // Predicated region
    $region30: #{tpu_custom_call.1} parent=1 // pred_check
      _
    $region31: #{tpu_custom_call.1} parent=1 // pred_check_branch
      %723 = sbr.rel (0) target = $region33
    $region32: #{tpu_custom_call.1} parent=1 // pred_region
      %s725 = ssub.s32 2048, 2048
      %726 = vsyncadd [#allocation4], %s725
      %s727 = sshll.u32 [#allocation5], 4
      %s728 = int_to_ptr.vmem [resolvable:$true] %s727
      %733 = dma.vmem_to_hbm [thread:$0]  %s728, 2048, %s6, [#allocation4], 128, 128, 8
    $region33: #{tpu_custom_call.1} parent=1 // pred_fallthru
      _
    // Predicated region
    $region34: #{tpu_custom_call.1} parent=1 // pred_check
      _
    $region35: #{tpu_custom_call.1} parent=1 // pred_check_branch
      %735 = sbr.rel (0) target = $region37
    $region36: #{tpu_custom_call.1} parent=1 // pred_region
      %736 = dma.done [#allocation4], 2048
    $region37: #{tpu_custom_call.1} parent=1 // pred_fallthru
      _
    %737 = vsyncpa [#allocation3], 1
    %738 = vsyncpa [#allocation4], 1

</llo_original>
